<compile_context>
chip_gen: v7x
topology: tpu7x:2x2x1
jax: 0.10.0
libtpu: 0.0.40
codegen_flags: <defaults>
</compile_context>

<pallas_src>
import jax
import jax.numpy as jnp
from jax import lax
from jax.experimental import pallas as pl
from jax.experimental.pallas import tpu as pltpu


def rythem_kernel(x_ref, wih_ref, whh_ref, b_ref, wfc_ref, bfc_ref, out_ref, gx_ref):
    """Whole LSTM + FC in a single invocation.

    x_ref   : (T*Bp, D)    time-major, batch padded to Bp, flattened to 2D
    wih_ref : (D, 4H)      W_ih^T
    whh_ref : (H, 4H)      W_hh^T
    b_ref   : (1, 4H)      b_ih + b_hh
    wfc_ref : (H, Op)      W_fc^T, output dim padded to lane-dense Op
    bfc_ref : (1, Op)
    out_ref : (Bp, Op)
    gx_ref  : (T*Bp, 4H)   VMEM scratch: precomputed input projection + bias
    """
    H = whh_ref.shape[0]
    Bp = out_ref.shape[0]
    T = x_ref.shape[0] // Bp

    # 1) Input projection for all timesteps at once (one MXU-friendly matmul);
    #    the combined bias is folded in here, hoisted out of the recurrent loop.
    gx_ref[...] = (jnp.dot(x_ref[...], wih_ref[...],
                           preferred_element_type=jnp.float32)
                   + b_ref[...])

    whh = whh_ref[...]  # hoist the resident recurrent weight load out of the loop

    # 2) Serial recurrence: one matmul + full-tile nonlinearities per step.
    def step(t, carry):
        h, c = carry
        row = pl.multiple_of(t * Bp, Bp)
        gates = gx_ref[pl.ds(row, Bp), :] + jnp.dot(
            h, whh, preferred_element_type=jnp.float32)            # (Bp, 4H)
        sg = jax.nn.sigmoid(gates)   # one EUP pass over the full 4H-lane tile
        th = jnp.tanh(gates)         # one EUP pass over the full 4H-lane tile
        i_g = sg[:, 0 * H:1 * H]
        f_g = sg[:, 1 * H:2 * H]
        g_g = th[:, 2 * H:3 * H]
        o_g = sg[:, 3 * H:4 * H]
        c_new = f_g * c + i_g * g_g
        h_new = o_g * jnp.tanh(c_new)
        return (h_new, c_new)

    h0 = jnp.zeros((Bp, H), jnp.float32)
    c0 = jnp.zeros((Bp, H), jnp.float32)
    h_t, _ = lax.fori_loop(0, T, step, (h0, c0), unroll=True)

    # 3) Final linear layer on the last hidden state (lane-dense padded output).
    out_ref[...] = (jnp.dot(h_t, wfc_ref[...], preferred_element_type=jnp.float32)
                    + bfc_ref[...]).astype(out_ref.dtype)


def rythem_ai_forward(x, params):
    """x: (B, T, D) float32 (PyTorch batch_first layout). Returns (B, O)."""
    B, T, D = x.shape
    w_ih, w_hh, b_ih, b_hh, w_fc, b_fc = (
        params["w_ih"], params["w_hh"], params["b_ih"],
        params["b_hh"], params["w_fc"], params["b_fc"])
    H = w_hh.shape[1]
    O = w_fc.shape[0]

    # Layout prep (cheap one-time XLA ops):
    Bp = max(8, ((B + 7) // 8) * 8)        # pad batch to the f32 sublane width
    Op = ((O + 127) // 128) * 128          # pad FC output to a lane-dense width

    x_tm = jnp.transpose(x, (1, 0, 2))                           # (T, B, D)
    x_tm = jnp.pad(x_tm, ((0, 0), (0, Bp - B), (0, 0)))          # (T, Bp, D)
    x_flat = x_tm.reshape(T * Bp, D)                             # (T*Bp, D)

    wih_t = jnp.transpose(w_ih)                                  # (D, 4H)
    whh_t = jnp.transpose(w_hh)                                  # (H, 4H)
    b_comb = (b_ih + b_hh).reshape(1, 4 * H)                     # (1, 4H)
    wfc_t = jnp.pad(jnp.transpose(w_fc), ((0, 0), (0, Op - O)))  # (H, Op)
    bfc_r = jnp.pad(b_fc.reshape(1, O), ((0, 0), (0, Op - O)))   # (1, Op)

    # Single invocation, everything VMEM-resident (tens of KiB total).
    out_padded = pl.pallas_call(
        rythem_kernel,
        out_shape=jax.ShapeDtypeStruct((Bp, Op), jnp.float32),
        scratch_shapes=[pltpu.VMEM((T * Bp, 4 * H), jnp.float32)],
    )(x_flat, wih_t, whh_t, b_comb, wfc_t, bfc_r)

    return out_padded[:B, :O]


def init_params(key, input_dim, hidden_dim, output_dim):
    """Deterministic init mirroring PyTorch parameter shapes (uniform(-k, k))."""
    k_lstm = 1.0 / jnp.sqrt(hidden_dim)
    k_fc = 1.0 / jnp.sqrt(hidden_dim)
    ks = jax.random.split(key, 6)
    u = lambda kk, shape, k: jax.random.uniform(kk, shape, jnp.float32, -k, k)
    return {
        "w_ih": u(ks[0], (4 * hidden_dim, input_dim), k_lstm),
        "w_hh": u(ks[1], (4 * hidden_dim, hidden_dim), k_lstm),
        "b_ih": u(ks[2], (4 * hidden_dim,), k_lstm),
        "b_hh": u(ks[3], (4 * hidden_dim,), k_lstm),
        "w_fc": u(ks[4], (output_dim, hidden_dim), k_fc),
        "b_fc": u(ks[5], (output_dim,), k_fc),
    }


def reference_forward(x, params):
    """Pure-JAX reference (lax.scan LSTM) for correctness checking."""
    B, T, D = x.shape
    H = params["w_hh"].shape[1]
    wih_t = params["w_ih"].T
    whh_t = params["w_hh"].T
    b = params["b_ih"] + params["b_hh"]

    def step(carry, x_t):
        h, c = carry
        gates = x_t @ wih_t + h @ whh_t + b
        i = jax.nn.sigmoid(gates[:, 0 * H:1 * H])
        f = jax.nn.sigmoid(gates[:, 1 * H:2 * H])
        g = jnp.tanh(gates[:, 2 * H:3 * H])
        o = jax.nn.sigmoid(gates[:, 3 * H:4 * H])
        c = f * c + i * g
        h = o * jnp.tanh(c)
        return (h, c), None

    h0 = jnp.zeros((B, H), jnp.float32)
    c0 = jnp.zeros((B, H), jnp.float32)
    (hT, _), _ = lax.scan(step, (h0, c0), jnp.transpose(x, (1, 0, 2)))
    return hT @ params["w_fc"].T + params["b_fc"]


if __name__ == "__main__":
    B, T = 2, 8
    input_dim, hidden_dim, output_dim = 16, 32, 8

    key = jax.random.PRNGKey(0)
    k_x, k_p = jax.random.split(key)
    x = jax.random.normal(k_x, (B, T, input_dim), jnp.float32)
    params = init_params(k_p, input_dim, hidden_dim, output_dim)

    out = rythem_ai_forward(x, params)
    out = jax.block_until_ready(out)

    ref = reference_forward(x, params)
    assert out.shape == (B, output_dim)
    assert jnp.allclose(out, ref, atol=1e-4, rtol=1e-4), "mismatch vs JAX reference"

    print("KERNEL_OK")
</pallas_src>

<mosaic_0001>
module attributes {stable_mosaic.version = 11 : i64} {
  func.func @rythem_kernel(%arg0: memref<64x16xf32, #tpu.memory_space<vmem>>, %arg1: memref<16x128xf32, #tpu.memory_space<vmem>>, %arg2: memref<32x128xf32, #tpu.memory_space<vmem>>, %arg3: memref<1x128xf32, #tpu.memory_space<vmem>>, %arg4: memref<32x128xf32, #tpu.memory_space<vmem>>, %arg5: memref<1x128xf32, #tpu.memory_space<vmem>>, %arg6: memref<8x128xf32, #tpu.memory_space<vmem>>, %arg7: memref<64x128xf32, #tpu.memory_space<vmem>>) attributes {dimension_semantics = [], scalar_prefetch = 0 : i64, scratch_operands = 1 : i64, tpu.core_type = #tpu.core_type<tc>} {
    %c0 = arith.constant 0 : index
    %c0_0 = arith.constant 0 : index
    %0 = vector.load %arg0[%c0, %c0_0] : memref<64x16xf32, #tpu.memory_space<vmem>>, vector<64x16xf32>
    %c0_1 = arith.constant 0 : index
    %c0_2 = arith.constant 0 : index
    %1 = vector.load %arg1[%c0_1, %c0_2] : memref<16x128xf32, #tpu.memory_space<vmem>>, vector<16x128xf32>
    %cst = arith.constant dense<0.000000e+00> : vector<64x128xf32>
    %2 = tpu.matmul %0, %1, %cst {dimension_numbers = #tpu.dot_dimension_numbers<[1], [0], [0], [1], [0, 0, 1, 1], [], []>} : vector<64x16xf32>, vector<16x128xf32>, vector<64x128xf32> -> vector<64x128xf32>
    %c0_3 = arith.constant 0 : index
    %c0_4 = arith.constant 0 : index
    %3 = vector.load %arg3[%c0_3, %c0_4] : memref<1x128xf32, #tpu.memory_space<vmem>>, vector<1x128xf32>
    %4 = vector.broadcast %3 : vector<1x128xf32> to vector<64x128xf32>
    %5 = arith.addf %2, %4 : vector<64x128xf32>
    %c0_5 = arith.constant 0 : index
    %c0_6 = arith.constant 0 : index
    %6 = vector.load %arg7[%c0_5, %c0_6] : memref<64x128xf32, #tpu.memory_space<vmem>>, vector<64x128xf32>
    tpu.vector_store %arg7[%c0_5, %c0_6], %5 {strides = array<i32>} : memref<64x128xf32, #tpu.memory_space<vmem>>, vector<64x128xf32>,
    %c0_7 = arith.constant 0 : index
    %c0_8 = arith.constant 0 : index
    %7 = vector.load %arg2[%c0_7, %c0_8] : memref<32x128xf32, #tpu.memory_space<vmem>>, vector<32x128xf32>
    %cst_9 = arith.constant 0.000000e+00 : f32
    %8 = vector.broadcast %cst_9 : f32 to vector<8x32xf32>
    %cst_10 = arith.constant 0.000000e+00 : f32
    %9 = vector.broadcast %cst_10 : f32 to vector<8x32xf32>
    %c0_i32 = arith.constant 0 : i32
    %c8_i32 = arith.constant 8 : i32
    %10 = arith.muli %c0_i32, %c8_i32 : i32
    %11 = tpu.assume_multiple %10, 8 : i32
    %12 = arith.index_cast %11 : i32 to index
    %c0_11 = arith.constant 0 : index
    %13 = vector.load %arg7[%12, %c0_11] : memref<64x128xf32, #tpu.memory_space<vmem>>, vector<8x128xf32>
    %cst_12 = arith.constant dense<0.000000e+00> : vector<8x128xf32>
    %14 = tpu.matmul %8, %7, %cst_12 {dimension_numbers = #tpu.dot_dimension_numbers<[1], [0], [0], [1], [0, 0, 1, 1], [], []>} : vector<8x32xf32>, vector<32x128xf32>, vector<8x128xf32> -> vector<8x128xf32>
    %15 = arith.addf %13, %14 : vector<8x128xf32>
    %16 = arith.negf %15 : vector<8x128xf32>
    %17 = math.exp %16 : vector<8x128xf32>
    %cst_13 = arith.constant 1.000000e+00 : f32
    %18 = vector.broadcast %cst_13 : f32 to vector<8x128xf32>
    %19 = arith.addf %18, %17 : vector<8x128xf32>
    %20 = arith.divf %18, %19 : vector<8x128xf32>
    %21 = math.tanh %15 : vector<8x128xf32>
    %22 = vector.extract_strided_slice %20 {offsets = [0, 0], sizes = [8, 32], strides = [1, 1]} : vector<8x128xf32> to vector<8x32xf32>
    %23 = vector.extract_strided_slice %20 {offsets = [0, 32], sizes = [8, 32], strides = [1, 1]} : vector<8x128xf32> to vector<8x32xf32>
    %24 = vector.extract_strided_slice %21 {offsets = [0, 64], sizes = [8, 32], strides = [1, 1]} : vector<8x128xf32> to vector<8x32xf32>
    %25 = vector.extract_strided_slice %20 {offsets = [0, 96], sizes = [8, 32], strides = [1, 1]} : vector<8x128xf32> to vector<8x32xf32>
    %26 = arith.mulf %23, %9 : vector<8x32xf32>
    %27 = arith.mulf %22, %24 : vector<8x32xf32>
    %28 = arith.addf %26, %27 : vector<8x32xf32>
    %29 = math.tanh %28 : vector<8x32xf32>
    %30 = arith.mulf %25, %29 : vector<8x32xf32>
    %c1_i32 = arith.constant 1 : i32
    %c8_i32_14 = arith.constant 8 : i32
    %31 = arith.muli %c1_i32, %c8_i32_14 : i32
    %32 = tpu.assume_multiple %31, 8 : i32
    %33 = arith.index_cast %32 : i32 to index
    %c0_15 = arith.constant 0 : index
    %34 = vector.load %arg7[%33, %c0_15] : memref<64x128xf32, #tpu.memory_space<vmem>>, vector<8x128xf32>
    %cst_16 = arith.constant dense<0.000000e+00> : vector<8x128xf32>
    %35 = tpu.matmul %30, %7, %cst_16 {dimension_numbers = #tpu.dot_dimension_numbers<[1], [0], [0], [1], [0, 0, 1, 1], [], []>} : vector<8x32xf32>, vector<32x128xf32>, vector<8x128xf32> -> vector<8x128xf32>
    %36 = arith.addf %34, %35 : vector<8x128xf32>
    %37 = arith.negf %36 : vector<8x128xf32>
    %38 = math.exp %37 : vector<8x128xf32>
    %cst_17 = arith.constant 1.000000e+00 : f32
    %39 = vector.broadcast %cst_17 : f32 to vector<8x128xf32>
    %40 = arith.addf %39, %38 : vector<8x128xf32>
    %41 = arith.divf %39, %40 : vector<8x128xf32>
    %42 = math.tanh %36 : vector<8x128xf32>
    %43 = vector.extract_strided_slice %41 {offsets = [0, 0], sizes = [8, 32], strides = [1, 1]} : vector<8x128xf32> to vector<8x32xf32>
    %44 = vector.extract_strided_slice %41 {offsets = [0, 32], sizes = [8, 32], strides = [1, 1]} : vector<8x128xf32> to vector<8x32xf32>
    %45 = vector.extract_strided_slice %42 {offsets = [0, 64], sizes = [8, 32], strides = [1, 1]} : vector<8x128xf32> to vector<8x32xf32>
    %46 = vector.extract_strided_slice %41 {offsets = [0, 96], sizes = [8, 32], strides = [1, 1]} : vector<8x128xf32> to vector<8x32xf32>
    %47 = arith.mulf %44, %28 : vector<8x32xf32>
    %48 = arith.mulf %43, %45 : vector<8x32xf32>
    %49 = arith.addf %47, %48 : vector<8x32xf32>
    %50 = math.tanh %49 : vector<8x32xf32>
    %51 = arith.mulf %46, %50 : vector<8x32xf32>
    %c2_i32 = arith.constant 2 : i32
    %c8_i32_18 = arith.constant 8 : i32
    %52 = arith.muli %c2_i32, %c8_i32_18 : i32
    %53 = tpu.assume_multiple %52, 8 : i32
    %54 = arith.index_cast %53 : i32 to index
    %c0_19 = arith.constant 0 : index
    %55 = vector.load %arg7[%54, %c0_19] : memref<64x128xf32, #tpu.memory_space<vmem>>, vector<8x128xf32>
    %cst_20 = arith.constant dense<0.000000e+00> : vector<8x128xf32>
    %56 = tpu.matmul %51, %7, %cst_20 {dimension_numbers = #tpu.dot_dimension_numbers<[1], [0], [0], [1], [0, 0, 1, 1], [], []>} : vector<8x32xf32>, vector<32x128xf32>, vector<8x128xf32> -> vector<8x128xf32>
    %57 = arith.addf %55, %56 : vector<8x128xf32>
    %58 = arith.negf %57 : vector<8x128xf32>
    %59 = math.exp %58 : vector<8x128xf32>
    %cst_21 = arith.constant 1.000000e+00 : f32
    %60 = vector.broadcast %cst_21 : f32 to vector<8x128xf32>
    %61 = arith.addf %60, %59 : vector<8x128xf32>
    %62 = arith.divf %60, %61 : vector<8x128xf32>
    %63 = math.tanh %57 : vector<8x128xf32>
    %64 = vector.extract_strided_slice %62 {offsets = [0, 0], sizes = [8, 32], strides = [1, 1]} : vector<8x128xf32> to vector<8x32xf32>
    %65 = vector.extract_strided_slice %62 {offsets = [0, 32], sizes = [8, 32], strides = [1, 1]} : vector<8x128xf32> to vector<8x32xf32>
    %66 = vector.extract_strided_slice %63 {offsets = [0, 64], sizes = [8, 32], strides = [1, 1]} : vector<8x128xf32> to vector<8x32xf32>
    %67 = vector.extract_strided_slice %62 {offsets = [0, 96], sizes = [8, 32], strides = [1, 1]} : vector<8x128xf32> to vector<8x32xf32>
    %68 = arith.mulf %65, %49 : vector<8x32xf32>
    %69 = arith.mulf %64, %66 : vector<8x32xf32>
    %70 = arith.addf %68, %69 : vector<8x32xf32>
    %71 = math.tanh %70 : vector<8x32xf32>
    %72 = arith.mulf %67, %71 : vector<8x32xf32>
    %c3_i32 = arith.constant 3 : i32
    %c8_i32_22 = arith.constant 8 : i32
    %73 = arith.muli %c3_i32, %c8_i32_22 : i32
    %74 = tpu.assume_multiple %73, 8 : i32
    %75 = arith.index_cast %74 : i32 to index
    %c0_23 = arith.constant 0 : index
    %76 = vector.load %arg7[%75, %c0_23] : memref<64x128xf32, #tpu.memory_space<vmem>>, vector<8x128xf32>
    %cst_24 = arith.constant dense<0.000000e+00> : vector<8x128xf32>
    %77 = tpu.matmul %72, %7, %cst_24 {dimension_numbers = #tpu.dot_dimension_numbers<[1], [0], [0], [1], [0, 0, 1, 1], [], []>} : vector<8x32xf32>, vector<32x128xf32>, vector<8x128xf32> -> vector<8x128xf32>
    %78 = arith.addf %76, %77 : vector<8x128xf32>
    %79 = arith.negf %78 : vector<8x128xf32>
    %80 = math.exp %79 : vector<8x128xf32>
    %cst_25 = arith.constant 1.000000e+00 : f32
    %81 = vector.broadcast %cst_25 : f32 to vector<8x128xf32>
    %82 = arith.addf %81, %80 : vector<8x128xf32>
    %83 = arith.divf %81, %82 : vector<8x128xf32>
    %84 = math.tanh %78 : vector<8x128xf32>
    %85 = vector.extract_strided_slice %83 {offsets = [0, 0], sizes = [8, 32], strides = [1, 1]} : vector<8x128xf32> to vector<8x32xf32>
    %86 = vector.extract_strided_slice %83 {offsets = [0, 32], sizes = [8, 32], strides = [1, 1]} : vector<8x128xf32> to vector<8x32xf32>
    %87 = vector.extract_strided_slice %84 {offsets = [0, 64], sizes = [8, 32], strides = [1, 1]} : vector<8x128xf32> to vector<8x32xf32>
    %88 = vector.extract_strided_slice %83 {offsets = [0, 96], sizes = [8, 32], strides = [1, 1]} : vector<8x128xf32> to vector<8x32xf32>
    %89 = arith.mulf %86, %70 : vector<8x32xf32>
    %90 = arith.mulf %85, %87 : vector<8x32xf32>
    %91 = arith.addf %89, %90 : vector<8x32xf32>
    %92 = math.tanh %91 : vector<8x32xf32>
    %93 = arith.mulf %88, %92 : vector<8x32xf32>
    %c4_i32 = arith.constant 4 : i32
    %c8_i32_26 = arith.constant 8 : i32
    %94 = arith.muli %c4_i32, %c8_i32_26 : i32
    %95 = tpu.assume_multiple %94, 8 : i32
    %96 = arith.index_cast %95 : i32 to index
    %c0_27 = arith.constant 0 : index
    %97 = vector.load %arg7[%96, %c0_27] : memref<64x128xf32, #tpu.memory_space<vmem>>, vector<8x128xf32>
    %cst_28 = arith.constant dense<0.000000e+00> : vector<8x128xf32>
    %98 = tpu.matmul %93, %7, %cst_28 {dimension_numbers = #tpu.dot_dimension_numbers<[1], [0], [0], [1], [0, 0, 1, 1], [], []>} : vector<8x32xf32>, vector<32x128xf32>, vector<8x128xf32> -> vector<8x128xf32>
    %99 = arith.addf %97, %98 : vector<8x128xf32>
    %100 = arith.negf %99 : vector<8x128xf32>
    %101 = math.exp %100 : vector<8x128xf32>
    %cst_29 = arith.constant 1.000000e+00 : f32
    %102 = vector.broadcast %cst_29 : f32 to vector<8x128xf32>
    %103 = arith.addf %102, %101 : vector<8x128xf32>
    %104 = arith.divf %102, %103 : vector<8x128xf32>
    %105 = math.tanh %99 : vector<8x128xf32>
    %106 = vector.extract_strided_slice %104 {offsets = [0, 0], sizes = [8, 32], strides = [1, 1]} : vector<8x128xf32> to vector<8x32xf32>
    %107 = vector.extract_strided_slice %104 {offsets = [0, 32], sizes = [8, 32], strides = [1, 1]} : vector<8x128xf32> to vector<8x32xf32>
    %108 = vector.extract_strided_slice %105 {offsets = [0, 64], sizes = [8, 32], strides = [1, 1]} : vector<8x128xf32> to vector<8x32xf32>
    %109 = vector.extract_strided_slice %104 {offsets = [0, 96], sizes = [8, 32], strides = [1, 1]} : vector<8x128xf32> to vector<8x32xf32>
    %110 = arith.mulf %107, %91 : vector<8x32xf32>
    %111 = arith.mulf %106, %108 : vector<8x32xf32>
    %112 = arith.addf %110, %111 : vector<8x32xf32>
    %113 = math.tanh %112 : vector<8x32xf32>
    %114 = arith.mulf %109, %113 : vector<8x32xf32>
    %c5_i32 = arith.constant 5 : i32
    %c8_i32_30 = arith.constant 8 : i32
    %115 = arith.muli %c5_i32, %c8_i32_30 : i32
    %116 = tpu.assume_multiple %115, 8 : i32
    %117 = arith.index_cast %116 : i32 to index
    %c0_31 = arith.constant 0 : index
    %118 = vector.load %arg7[%117, %c0_31] : memref<64x128xf32, #tpu.memory_space<vmem>>, vector<8x128xf32>
    %cst_32 = arith.constant dense<0.000000e+00> : vector<8x128xf32>
    %119 = tpu.matmul %114, %7, %cst_32 {dimension_numbers = #tpu.dot_dimension_numbers<[1], [0], [0], [1], [0, 0, 1, 1], [], []>} : vector<8x32xf32>, vector<32x128xf32>, vector<8x128xf32> -> vector<8x128xf32>
    %120 = arith.addf %118, %119 : vector<8x128xf32>
    %121 = arith.negf %120 : vector<8x128xf32>
    %122 = math.exp %121 : vector<8x128xf32>
    %cst_33 = arith.constant 1.000000e+00 : f32
    %123 = vector.broadcast %cst_33 : f32 to vector<8x128xf32>
    %124 = arith.addf %123, %122 : vector<8x128xf32>
    %125 = arith.divf %123, %124 : vector<8x128xf32>
    %126 = math.tanh %120 : vector<8x128xf32>
    %127 = vector.extract_strided_slice %125 {offsets = [0, 0], sizes = [8, 32], strides = [1, 1]} : vector<8x128xf32> to vector<8x32xf32>
    %128 = vector.extract_strided_slice %125 {offsets = [0, 32], sizes = [8, 32], strides = [1, 1]} : vector<8x128xf32> to vector<8x32xf32>
    %129 = vector.extract_strided_slice %126 {offsets = [0, 64], sizes = [8, 32], strides = [1, 1]} : vector<8x128xf32> to vector<8x32xf32>
    %130 = vector.extract_strided_slice %125 {offsets = [0, 96], sizes = [8, 32], strides = [1, 1]} : vector<8x128xf32> to vector<8x32xf32>
    %131 = arith.mulf %128, %112 : vector<8x32xf32>
    %132 = arith.mulf %127, %129 : vector<8x32xf32>
    %133 = arith.addf %131, %132 : vector<8x32xf32>
    %134 = math.tanh %133 : vector<8x32xf32>
    %135 = arith.mulf %130, %134 : vector<8x32xf32>
    %c6_i32 = arith.constant 6 : i32
    %c8_i32_34 = arith.constant 8 : i32
    %136 = arith.muli %c6_i32, %c8_i32_34 : i32
    %137 = tpu.assume_multiple %136, 8 : i32
    %138 = arith.index_cast %137 : i32 to index
    %c0_35 = arith.constant 0 : index
    %139 = vector.load %arg7[%138, %c0_35] : memref<64x128xf32, #tpu.memory_space<vmem>>, vector<8x128xf32>
    %cst_36 = arith.constant dense<0.000000e+00> : vector<8x128xf32>
    %140 = tpu.matmul %135, %7, %cst_36 {dimension_numbers = #tpu.dot_dimension_numbers<[1], [0], [0], [1], [0, 0, 1, 1], [], []>} : vector<8x32xf32>, vector<32x128xf32>, vector<8x128xf32> -> vector<8x128xf32>
    %141 = arith.addf %139, %140 : vector<8x128xf32>
    %142 = arith.negf %141 : vector<8x128xf32>
    %143 = math.exp %142 : vector<8x128xf32>
    %cst_37 = arith.constant 1.000000e+00 : f32
    %144 = vector.broadcast %cst_37 : f32 to vector<8x128xf32>
    %145 = arith.addf %144, %143 : vector<8x128xf32>
    %146 = arith.divf %144, %145 : vector<8x128xf32>
    %147 = math.tanh %141 : vector<8x128xf32>
    %148 = vector.extract_strided_slice %146 {offsets = [0, 0], sizes = [8, 32], strides = [1, 1]} : vector<8x128xf32> to vector<8x32xf32>
    %149 = vector.extract_strided_slice %146 {offsets = [0, 32], sizes = [8, 32], strides = [1, 1]} : vector<8x128xf32> to vector<8x32xf32>
    %150 = vector.extract_strided_slice %147 {offsets = [0, 64], sizes = [8, 32], strides = [1, 1]} : vector<8x128xf32> to vector<8x32xf32>
    %151 = vector.extract_strided_slice %146 {offsets = [0, 96], sizes = [8, 32], strides = [1, 1]} : vector<8x128xf32> to vector<8x32xf32>
    %152 = arith.mulf %149, %133 : vector<8x32xf32>
    %153 = arith.mulf %148, %150 : vector<8x32xf32>
    %154 = arith.addf %152, %153 : vector<8x32xf32>
    %155 = math.tanh %154 : vector<8x32xf32>
    %156 = arith.mulf %151, %155 : vector<8x32xf32>
    %c7_i32 = arith.constant 7 : i32
    %c8_i32_38 = arith.constant 8 : i32
    %157 = arith.muli %c7_i32, %c8_i32_38 : i32
    %158 = tpu.assume_multiple %157, 8 : i32
    %159 = arith.index_cast %158 : i32 to index
    %c0_39 = arith.constant 0 : index
    %160 = vector.load %arg7[%159, %c0_39] : memref<64x128xf32, #tpu.memory_space<vmem>>, vector<8x128xf32>
    %cst_40 = arith.constant dense<0.000000e+00> : vector<8x128xf32>
    %161 = tpu.matmul %156, %7, %cst_40 {dimension_numbers = #tpu.dot_dimension_numbers<[1], [0], [0], [1], [0, 0, 1, 1], [], []>} : vector<8x32xf32>, vector<32x128xf32>, vector<8x128xf32> -> vector<8x128xf32>
    %162 = arith.addf %160, %161 : vector<8x128xf32>
    %163 = arith.negf %162 : vector<8x128xf32>
    %164 = math.exp %163 : vector<8x128xf32>
    %cst_41 = arith.constant 1.000000e+00 : f32
    %165 = vector.broadcast %cst_41 : f32 to vector<8x128xf32>
    %166 = arith.addf %165, %164 : vector<8x128xf32>
    %167 = arith.divf %165, %166 : vector<8x128xf32>
    %168 = math.tanh %162 : vector<8x128xf32>
    %169 = vector.extract_strided_slice %167 {offsets = [0, 0], sizes = [8, 32], strides = [1, 1]} : vector<8x128xf32> to vector<8x32xf32>
    %170 = vector.extract_strided_slice %167 {offsets = [0, 32], sizes = [8, 32], strides = [1, 1]} : vector<8x128xf32> to vector<8x32xf32>
    %171 = vector.extract_strided_slice %168 {offsets = [0, 64], sizes = [8, 32], strides = [1, 1]} : vector<8x128xf32> to vector<8x32xf32>
    %172 = vector.extract_strided_slice %167 {offsets = [0, 96], sizes = [8, 32], strides = [1, 1]} : vector<8x128xf32> to vector<8x32xf32>
    %173 = arith.mulf %170, %154 : vector<8x32xf32>
    %174 = arith.mulf %169, %171 : vector<8x32xf32>
    %175 = arith.addf %173, %174 : vector<8x32xf32>
    %176 = math.tanh %175 : vector<8x32xf32>
    %177 = arith.mulf %172, %176 : vector<8x32xf32>
    %c8_i32_42 = arith.constant 8 : i32
    %c0_43 = arith.constant 0 : index
    %c0_44 = arith.constant 0 : index
    %178 = vector.load %arg4[%c0_43, %c0_44] : memref<32x128xf32, #tpu.memory_space<vmem>>, vector<32x128xf32>
    %cst_45 = arith.constant dense<0.000000e+00> : vector<8x128xf32>
    %179 = tpu.matmul %177, %178, %cst_45 {dimension_numbers = #tpu.dot_dimension_numbers<[1], [0], [0], [1], [0, 0, 1, 1], [], []>} : vector<8x32xf32>, vector<32x128xf32>, vector<8x128xf32> -> vector<8x128xf32>
    %c0_46 = arith.constant 0 : index
    %c0_47 = arith.constant 0 : index
    %180 = vector.load %arg5[%c0_46, %c0_47] : memref<1x128xf32, #tpu.memory_space<vmem>>, vector<1x128xf32>
    %181 = vector.broadcast %180 : vector<1x128xf32> to vector<8x128xf32>
    %182 = arith.addf %179, %181 : vector<8x128xf32>
    %c0_48 = arith.constant 0 : index
    %c0_49 = arith.constant 0 : index
    %183 = vector.load %arg6[%c0_48, %c0_49] : memref<8x128xf32, #tpu.memory_space<vmem>>, vector<8x128xf32>
    tpu.vector_store %arg6[%c0_48, %c0_49], %182 {strides = array<i32>} : memref<8x128xf32, #tpu.memory_space<vmem>>, vector<8x128xf32>,
    return
  }
}

</mosaic_0001>

<llo_original>
// kernel: tpu_custom_call.1
$region0: #{tpu_custom_call.1}
  #allocation0 [shape = 'u32[]', space=smem, size = 0x4, offset = 0x4, fixed_abs, tag = 'smem constant byte address 0x4 - core index']
  #allocation1 [shape = 'u32[144,128]{1,0:T(1,128)}', space=vmem, size = 0x12000, scoped, tag = 'internal scratch']
  #allocation2 [shape = 'f32[64,128]{1,0:T(8,128)}', space=vmem, size = 0x8000, scoped, tag = 'scratch operand']
  %s0 = inlined_call_operand.vmem [shape: f32[64,16], index: 0, kind: input, shape index: {}]
  %s1 = inlined_call_operand.vmem [shape: f32[16,128], index: 1, kind: input, shape index: {}]
  %s2 = inlined_call_operand.vmem [shape: f32[32,128], index: 2, kind: input, shape index: {}]
  %s3 = inlined_call_operand.vmem [shape: f32[1,128], index: 3, kind: input, shape index: {}]
  %s4 = inlined_call_operand.vmem [shape: f32[32,128], index: 4, kind: input, shape index: {}]
  %s5 = inlined_call_operand.vmem [shape: f32[1,128], index: 5, kind: input, shape index: {}]
  %s6 = inlined_call_operand.hbm [shape: f32[8,128], index: 6, kind: output, shape index: {}]
  %s7 = sld [smem:[#allocation0]]
  $region34: #{tpu_custom_call.1} parent=0
    _
  %s9 = ssub.s32 1, %s7
  %s10 = scalar_select 0, %s9, %s7
  $region1: #{tpu_custom_call.1} parent=0
    #allocation3 [shape = 'u8[4096]{0}', space=vmem, size = 0x1000, scoped, tag = 'output window, operand 0, single buffered']
    #allocation4 [shape = 's32[1]{0}', space=sflag, size = 0x4, scoped, tag = 'scoped memory for tpu_custom_call.1']
    %11 = vsyncpa [#allocation4], 0
    // Predicated region
    $region2: #{tpu_custom_call.1} parent=1 // pred_check
      _
    $region3: #{tpu_custom_call.1} parent=1 // pred_check_branch
      %13 = sbr.rel (0) target = $region5
    $region4: #{tpu_custom_call.1} parent=1 // pred_region
      _
    $region5: #{tpu_custom_call.1} parent=1 // pred_fallthru
      _
    // Predicated region
    $region6: #{tpu_custom_call.1} parent=1 // pred_check
      _
    $region7: #{tpu_custom_call.1} parent=1 // pred_check_branch
      %15 = sbr.rel (0) target = $region9
    $region8: #{tpu_custom_call.1} parent=1 // pred_region
      _
    $region9: #{tpu_custom_call.1} parent=1 // pred_fallthru
      _
    // Predicated region
    $region10: #{tpu_custom_call.1} parent=1 // pred_check
      _
    $region11: #{tpu_custom_call.1} parent=1 // pred_check_branch
      %17 = sbr.rel (0) target = $region13
    $region12: #{tpu_custom_call.1} parent=1 // pred_region
      _
    $region13: #{tpu_custom_call.1} parent=1 // pred_fallthru
      _
    // Predicated region
    $region14: #{tpu_custom_call.1} parent=1 // pred_check
      _
    $region15: #{tpu_custom_call.1} parent=1 // pred_check_branch
      %19 = sbr.rel (0) target = $region17
    $region16: #{tpu_custom_call.1} parent=1 // pred_region
      _
    $region17: #{tpu_custom_call.1} parent=1 // pred_fallthru
      _
    // Predicated region
    $region18: #{tpu_custom_call.1} parent=1 // pred_check
      _
    $region19: #{tpu_custom_call.1} parent=1 // pred_check_branch
      %21 = sbr.rel (0) target = $region21
    $region20: #{tpu_custom_call.1} parent=1 // pred_region
      _
    $region21: #{tpu_custom_call.1} parent=1 // pred_fallthru
      _
    // Predicated region
    $region22: #{tpu_custom_call.1} parent=1 // pred_check
      _
    $region23: #{tpu_custom_call.1} parent=1 // pred_check_branch
      %23 = sbr.rel (0) target = $region25
    $region24: #{tpu_custom_call.1} parent=1 // pred_region
      _
    $region25: #{tpu_custom_call.1} parent=1 // pred_fallthru
      _
    %v24 = vld [vmem:[%s0] sm:$0xff]
    %v25 = vld [vmem:[%s0 + $0x8] sm:$0xff]
    %v26 = vld [vmem:[%s0 + $0x10] sm:$0xff]
    %v27 = vld [vmem:[%s0 + $0x18] sm:$0xff]
    %v28 = vld [vmem:[%s0 + $0x20] sm:$0xff]
    %v29 = vld [vmem:[%s0 + $0x28] sm:$0xff]
    %v30 = vld [vmem:[%s0 + $0x30] sm:$0xff]
    %v31 = vld [vmem:[%s0 + $0x38] sm:$0xff]
    %v32 = vld [vmem:[%s1] sm:$0xff]
    %v33 = vld [vmem:[%s1 + $0x8] sm:$0xff]
    %v34 = vld [vmem:[%s3] sm:$0x1]
    %v36 = vlaneseq
    %v37 = vshrl.u32 %v36, 7
    %v38 = vsub.s32 0, %v37
    %v39 = vrot.slane %v34, %v38
    %vm41 = vcmask 130048
    %v43 = vsel %vm41, %v24, 0
    %v46 = vsel %vm41, %v25, 0
    %v49 = vsel %vm41, %v26, 0
    %v52 = vsel %vm41, %v27, 0
    %v55 = vsel %vm41, %v28, 0
    %v58 = vsel %vm41, %v29, 0
    %v61 = vsel %vm41, %v30, 0
    %v64 = vsel %vm41, %v31, 0
    %66 = vmatprep.subr.mxu0 0.0
    %67 = vmatpush1.msra.mxu0 %v32
    %68 = vmatprep.subr.mxu0 0.0
    %69 = vmatpush1.msra.mxu0 %v33
    %70 = vmatprep.subr.mxu0 0.0
    %71 = vmatpush1.msra.mxu0 0.0
    %72 = vmatprep.subr.mxu0 0.0
    %73 = vmatpush1.msra.mxu0 0.0
    %74 = vmatprep.subr.mxu0 0.0
    %75 = vmatpush1.msra.mxu0 0.0
    %76 = vmatprep.subr.mxu0 0.0
    %77 = vmatpush1.msra.mxu0 0.0
    %78 = vmatprep.subr.mxu0 0.0
    %79 = vmatpush1.msra.mxu0 0.0
    %80 = vmatprep.subr.mxu0 0.0
    %81 = vmatpush1.msra.mxu0 0.0
    %82 = vmatprep.subr.mxu0 0.0
    %83 = vmatpush1.msra.mxu0 0.0
    %84 = vmatprep.subr.mxu0 0.0
    %85 = vmatpush1.msra.mxu0 0.0
    %86 = vmatprep.subr.mxu0 0.0
    %87 = vmatpush1.msra.mxu0 0.0
    %88 = vmatprep.subr.mxu0 0.0
    %89 = vmatpush1.msra.mxu0 0.0
    %90 = vmatprep.subr.mxu0 0.0
    %91 = vmatpush1.msra.mxu0 0.0
    %92 = vmatprep.subr.mxu0 0.0
    %93 = vmatpush1.msra.mxu0 0.0
    %94 = vmatprep.subr.mxu0 0.0
    %95 = vmatpush1.msra.mxu0 0.0
    %96 = vmatprep.subr.mxu0 0.0
    %97 = vmatpush1.msra.mxu0 0.0
    %98 = vmatprep.subr.mxu0 0.0
    %99 = vmatpush1.msra.mxu0 0.0
    %100 = vmatprep.subr.mxu0 0.0
    %101 = vmatpush1.msra.mxu0 0.0
    %102 = vmatprep.subr.mxu0 0.0
    %103 = vmatpush1.msra.mxu0 0.0
    %104 = vmatprep.subr.mxu0 0.0
    %105 = vmatpush1.msra.mxu0 0.0
    %106 = vmatprep.subr.mxu0 0.0
    %107 = vmatpush1.msra.mxu0 0.0
    %108 = vmatprep.subr.mxu0 0.0
    %109 = vmatpush1.msra.mxu0 0.0
    %110 = vmatprep.subr.mxu0 0.0
    %111 = vmatpush1.msra.mxu0 0.0
    %112 = vmatprep.subr.mxu0 0.0
    %113 = vmatpush1.msra.mxu0 0.0
    %114 = vmatprep.subr.mxu0 0.0
    %115 = vmatpush1.msra.mxu0 0.0
    %116 = vmatprep.subr.mxu0 0.0
    %117 = vmatpush1.msra.mxu0 0.0
    %118 = vmatprep.subr.mxu0 0.0
    %119 = vmatpush1.msra.mxu0 0.0
    %120 = vmatprep.subr.mxu0 0.0
    %121 = vmatpush1.msra.mxu0 0.0
    %122 = vmatprep.subr.mxu0 0.0
    %123 = vmatpush1.msra.mxu0 0.0
    %124 = vmatprep.subr.mxu0 0.0
    %125 = vmatpush1.msra.mxu0 0.0
    %126 = vmatprep.subr.mxu0 0.0
    %127 = vmatpush1.msra.mxu0 0.0
    %128 = vmatprep.subr.mxu0 0.0
    %129 = vmatpush1.msra.mxu0 0.0
    %130 = vmatprep.mubr.f32.mxu0 0.0
    %131 = vmatmul.mubr.f32.gmra.mrb[0].mxu0 %v43
    %v132 = vpop.f32.mrb[0].mxu0
    %v133 = vadd.f32 %v39, %v132
    %v134 = vpop.f32.mrb[0].mxu0
    %135 = vmatprep.mubr.f32.mxu0 0.0
    %136 = vmatmul.mubr.f32.gmra.mrb[0].mxu0 %v46
    %v137 = vpop.f32.mrb[0].mxu0
    %v138 = vadd.f32 %v39, %v137
    %v139 = vpop.f32.mrb[0].mxu0
    %140 = vmatprep.mubr.f32.mxu0 0.0
    %141 = vmatmul.mubr.f32.gmra.mrb[0].mxu0 %v49
    %v142 = vpop.f32.mrb[0].mxu0
    %v143 = vadd.f32 %v39, %v142
    %v144 = vpop.f32.mrb[0].mxu0
    %145 = vmatprep.mubr.f32.mxu0 0.0
    %146 = vmatmul.mubr.f32.gmra.mrb[0].mxu0 %v52
    %v147 = vpop.f32.mrb[0].mxu0
    %v148 = vadd.f32 %v39, %v147
    %v149 = vpop.f32.mrb[0].mxu0
    %150 = vmatprep.mubr.f32.mxu0 0.0
    %151 = vmatmul.mubr.f32.gmra.mrb[0].mxu0 %v55
    %v152 = vpop.f32.mrb[0].mxu0
    %v153 = vadd.f32 %v39, %v152
    %v154 = vpop.f32.mrb[0].mxu0
    %155 = vmatprep.mubr.f32.mxu0 0.0
    %156 = vmatmul.mubr.f32.gmra.mrb[0].mxu0 %v58
    %v157 = vpop.f32.mrb[0].mxu0
    %v158 = vadd.f32 %v39, %v157
    %v159 = vpop.f32.mrb[0].mxu0
    %160 = vmatprep.mubr.f32.mxu0 0.0
    %161 = vmatmul.mubr.f32.gmra.mrb[0].mxu0 %v61
    %v162 = vpop.f32.mrb[0].mxu0
    %v163 = vadd.f32 %v39, %v162
    %v164 = vpop.f32.mrb[0].mxu0
    %165 = vmatprep.mubr.f32.mxu0 0.0
    %166 = vmatmul.mubr.f32.gmra.mrb[0].mxu0 %v64
    %v167 = vpop.f32.mrb[0].mxu0
    %v168 = vadd.f32 %v39, %v167
    %v169 = vpop.f32.mrb[0].mxu0
    %170 = vdwg.mxu0
    %171 = vst [vmem:[#allocation2] sm:$0xff] %v133
    %172 = vst [vmem:[#allocation2 + $0x8] sm:$0xff] %v138
    %173 = vst [vmem:[#allocation2 + $0x10] sm:$0xff] %v143
    %174 = vst [vmem:[#allocation2 + $0x18] sm:$0xff] %v148
    %175 = vst [vmem:[#allocation2 + $0x20] sm:$0xff] %v153
    %176 = vst [vmem:[#allocation2 + $0x28] sm:$0xff] %v158
    %177 = vst [vmem:[#allocation2 + $0x30] sm:$0xff] %v163
    %178 = vst [vmem:[#allocation2 + $0x38] sm:$0xff] %v168
    %v179 = vld [vmem:[%s2] sm:$0xff]
    %v180 = vld [vmem:[%s2 + $0x8] sm:$0xff]
    %v181 = vld [vmem:[%s2 + $0x10] sm:$0xff]
    %v182 = vld [vmem:[%s2 + $0x18] sm:$0xff]
    %v183 = vld [vmem:[#allocation2] sm:$0xff]
    %vm184 = vcmask 261120
    %v186 = vsel %vm184, 0.0, 0
    %188 = vmatprep.subr.mxu0 0.0
    %189 = vmatpush1.msra.mxu0 %v179
    %190 = vmatprep.subr.mxu0 0.0
    %191 = vmatpush1.msra.mxu0 %v180
    %192 = vmatprep.subr.mxu0 0.0
    %193 = vmatpush1.msra.mxu0 %v181
    %194 = vmatprep.subr.mxu0 0.0
    %195 = vmatpush1.msra.mxu0 %v182
    %196 = vmatprep.subr.mxu0 0.0
    %197 = vmatpush1.msra.mxu0 0.0
    %198 = vmatprep.subr.mxu0 0.0
    %199 = vmatpush1.msra.mxu0 0.0
    %200 = vmatprep.subr.mxu0 0.0
    %201 = vmatpush1.msra.mxu0 0.0
    %202 = vmatprep.subr.mxu0 0.0
    %203 = vmatpush1.msra.mxu0 0.0
    %204 = vmatprep.subr.mxu0 0.0
    %205 = vmatpush1.msra.mxu0 0.0
    %206 = vmatprep.subr.mxu0 0.0
    %207 = vmatpush1.msra.mxu0 0.0
    %208 = vmatprep.subr.mxu0 0.0
    %209 = vmatpush1.msra.mxu0 0.0
    %210 = vmatprep.subr.mxu0 0.0
    %211 = vmatpush1.msra.mxu0 0.0
    %212 = vmatprep.subr.mxu0 0.0
    %213 = vmatpush1.msra.mxu0 0.0
    %214 = vmatprep.subr.mxu0 0.0
    %215 = vmatpush1.msra.mxu0 0.0
    %216 = vmatprep.subr.mxu0 0.0
    %217 = vmatpush1.msra.mxu0 0.0
    %218 = vmatprep.subr.mxu0 0.0
    %219 = vmatpush1.msra.mxu0 0.0
    %220 = vmatprep.subr.mxu0 0.0
    %221 = vmatpush1.msra.mxu0 0.0
    %222 = vmatprep.subr.mxu0 0.0
    %223 = vmatpush1.msra.mxu0 0.0
    %224 = vmatprep.subr.mxu0 0.0
    %225 = vmatpush1.msra.mxu0 0.0
    %226 = vmatprep.subr.mxu0 0.0
    %227 = vmatpush1.msra.mxu0 0.0
    %228 = vmatprep.subr.mxu0 0.0
    %229 = vmatpush1.msra.mxu0 0.0
    %230 = vmatprep.subr.mxu0 0.0
    %231 = vmatpush1.msra.mxu0 0.0
    %232 = vmatprep.subr.mxu0 0.0
    %233 = vmatpush1.msra.mxu0 0.0
    %234 = vmatprep.subr.mxu0 0.0
    %235 = vmatpush1.msra.mxu0 0.0
    %236 = vmatprep.subr.mxu0 0.0
    %237 = vmatpush1.msra.mxu0 0.0
    %238 = vmatprep.subr.mxu0 0.0
    %239 = vmatpush1.msra.mxu0 0.0
    %240 = vmatprep.subr.mxu0 0.0
    %241 = vmatpush1.msra.mxu0 0.0
    %242 = vmatprep.subr.mxu0 0.0
    %243 = vmatpush1.msra.mxu0 0.0
    %244 = vmatprep.subr.mxu0 0.0
    %245 = vmatpush1.msra.mxu0 0.0
    %246 = vmatprep.subr.mxu0 0.0
    %247 = vmatpush1.msra.mxu0 0.0
    %248 = vmatprep.subr.mxu0 0.0
    %249 = vmatpush1.msra.mxu0 0.0
    %250 = vmatprep.subr.mxu0 0.0
    %251 = vmatpush1.msra.mxu0 0.0
    %252 = vmatprep.mubr.f32.mxu0 0.0
    %253 = vmatmul.mubr.f32.gmra.mrb[0].mxu0 %v186
    %v254 = vpop.f32.mrb[0].mxu0
    %v255 = vadd.f32 0.0, %v254
    %v256 = vpop.f32.mrb[0].mxu0
    %257 = vdwg.mxu0
    %v258 = vadd.f32 %v183, %v255
    %v259 = vxor.u32 %v258, 2147483648
    %v260 = vmul.f32 %v259, 1.442695
    %v261 = vpow.pop %v260
    %v262 = vadd.f32 %v261, 1.0
    %v263 = vrcp.pop %v262
    %v264 = vmul.f32 1.0, %v263
    %v265 = vtanh.pop %v258
    %v266 = vmul.f32 %v264, 0.0
    %268 = vrot.lane.b32.xlu0 %v265, 64
    %v269 = vpop.permute.xlu0 %268
    %v271 = vmul.f32 %v264, %v269
    %273 = vrot.lane.b32.xlu0 %v271, 32
    %v274 = vpop.permute.xlu0 %273
    %v276 = vadd.f32 %v266, %v274
    %v277 = vtanh.pop %v276
    %279 = vrot.lane.b32.xlu0 %v277, 64
    %v280 = vpop.permute.xlu0 %279
    %v282 = vmul.f32 %v264, %v280
    %s283 = scalar_lea.vmem [#allocation2], 8
    %v284 = vld [vmem:[%s283] sm:$0xff]
    %286 = vrot.lane.b32.xlu0 %v282, 32
    %v287 = vpop.permute.xlu0 %286
    %v288 = vsel %vm184, %v287, 0
    %290 = vmatprep.subr.mxu0 0.0
    %291 = vmatpush1.msra.mxu0 %v179
    %292 = vmatprep.subr.mxu0 0.0
    %293 = vmatpush1.msra.mxu0 %v180
    %294 = vmatprep.subr.mxu0 0.0
    %295 = vmatpush1.msra.mxu0 %v181
    %296 = vmatprep.subr.mxu0 0.0
    %297 = vmatpush1.msra.mxu0 %v182
    %298 = vmatprep.subr.mxu0 0.0
    %299 = vmatpush1.msra.mxu0 0.0
    %300 = vmatprep.subr.mxu0 0.0
    %301 = vmatpush1.msra.mxu0 0.0
    %302 = vmatprep.subr.mxu0 0.0
    %303 = vmatpush1.msra.mxu0 0.0
    %304 = vmatprep.subr.mxu0 0.0
    %305 = vmatpush1.msra.mxu0 0.0
    %306 = vmatprep.subr.mxu0 0.0
    %307 = vmatpush1.msra.mxu0 0.0
    %308 = vmatprep.subr.mxu0 0.0
    %309 = vmatpush1.msra.mxu0 0.0
    %310 = vmatprep.subr.mxu0 0.0
    %311 = vmatpush1.msra.mxu0 0.0
    %312 = vmatprep.subr.mxu0 0.0
    %313 = vmatpush1.msra.mxu0 0.0
    %314 = vmatprep.subr.mxu0 0.0
    %315 = vmatpush1.msra.mxu0 0.0
    %316 = vmatprep.subr.mxu0 0.0
    %317 = vmatpush1.msra.mxu0 0.0
    %318 = vmatprep.subr.mxu0 0.0
    %319 = vmatpush1.msra.mxu0 0.0
    %320 = vmatprep.subr.mxu0 0.0
    %321 = vmatpush1.msra.mxu0 0.0
    %322 = vmatprep.subr.mxu0 0.0
    %323 = vmatpush1.msra.mxu0 0.0
    %324 = vmatprep.subr.mxu0 0.0
    %325 = vmatpush1.msra.mxu0 0.0
    %326 = vmatprep.subr.mxu0 0.0
    %327 = vmatpush1.msra.mxu0 0.0
    %328 = vmatprep.subr.mxu0 0.0
    %329 = vmatpush1.msra.mxu0 0.0
    %330 = vmatprep.subr.mxu0 0.0
    %331 = vmatpush1.msra.mxu0 0.0
    %332 = vmatprep.subr.mxu0 0.0
    %333 = vmatpush1.msra.mxu0 0.0
    %334 = vmatprep.subr.mxu0 0.0
    %335 = vmatpush1.msra.mxu0 0.0
    %336 = vmatprep.subr.mxu0 0.0
    %337 = vmatpush1.msra.mxu0 0.0
    %338 = vmatprep.subr.mxu0 0.0
    %339 = vmatpush1.msra.mxu0 0.0
    %340 = vmatprep.subr.mxu0 0.0
    %341 = vmatpush1.msra.mxu0 0.0
    %342 = vmatprep.subr.mxu0 0.0
    %343 = vmatpush1.msra.mxu0 0.0
    %344 = vmatprep.subr.mxu0 0.0
    %345 = vmatpush1.msra.mxu0 0.0
    %346 = vmatprep.subr.mxu0 0.0
    %347 = vmatpush1.msra.mxu0 0.0
    %348 = vmatprep.subr.mxu0 0.0
    %349 = vmatpush1.msra.mxu0 0.0
    %350 = vmatprep.subr.mxu0 0.0
    %351 = vmatpush1.msra.mxu0 0.0
    %352 = vmatprep.subr.mxu0 0.0
    %353 = vmatpush1.msra.mxu0 0.0
    %354 = vmatprep.mubr.f32.mxu0 0.0
    %355 = vmatmul.mubr.f32.gmra.mrb[0].mxu0 %v288
    %v356 = vpop.f32.mrb[0].mxu0
    %v357 = vadd.f32 0.0, %v356
    %v358 = vpop.f32.mrb[0].mxu0
    %359 = vdwg.mxu0
    %v360 = vadd.f32 %v284, %v357
    %v361 = vxor.u32 %v360, 2147483648
    %v362 = vmul.f32 %v361, 1.442695
    %v363 = vpow.pop %v362
    %v364 = vadd.f32 %v363, 1.0
    %v365 = vrcp.pop %v364
    %v366 = vmul.f32 1.0, %v365
    %v367 = vtanh.pop %v360
    %v368 = vmul.f32 %v366, %v276
    %370 = vrot.lane.b32.xlu0 %v367, 64
    %v371 = vpop.permute.xlu0 %370
    %v373 = vmul.f32 %v366, %v371
    %375 = vrot.lane.b32.xlu0 %v373, 32
    %v376 = vpop.permute.xlu0 %375
    %v378 = vadd.f32 %v368, %v376
    %v379 = vtanh.pop %v378
    %381 = vrot.lane.b32.xlu0 %v379, 64
    %v382 = vpop.permute.xlu0 %381
    %v384 = vmul.f32 %v366, %v382
    %s385 = scalar_lea.vmem [#allocation2], 16
    %v386 = vld [vmem:[%s385] sm:$0xff]
    %388 = vrot.lane.b32.xlu0 %v384, 32
    %v389 = vpop.permute.xlu0 %388
    %v390 = vsel %vm184, %v389, 0
    %392 = vmatprep.subr.mxu0 0.0
    %393 = vmatpush1.msra.mxu0 %v179
    %394 = vmatprep.subr.mxu0 0.0
    %395 = vmatpush1.msra.mxu0 %v180
    %396 = vmatprep.subr.mxu0 0.0
    %397 = vmatpush1.msra.mxu0 %v181
    %398 = vmatprep.subr.mxu0 0.0
    %399 = vmatpush1.msra.mxu0 %v182
    %400 = vmatprep.subr.mxu0 0.0
    %401 = vmatpush1.msra.mxu0 0.0
    %402 = vmatprep.subr.mxu0 0.0
    %403 = vmatpush1.msra.mxu0 0.0
    %404 = vmatprep.subr.mxu0 0.0
    %405 = vmatpush1.msra.mxu0 0.0
    %406 = vmatprep.subr.mxu0 0.0
    %407 = vmatpush1.msra.mxu0 0.0
    %408 = vmatprep.subr.mxu0 0.0
    %409 = vmatpush1.msra.mxu0 0.0
    %410 = vmatprep.subr.mxu0 0.0
    %411 = vmatpush1.msra.mxu0 0.0
    %412 = vmatprep.subr.mxu0 0.0
    %413 = vmatpush1.msra.mxu0 0.0
    %414 = vmatprep.subr.mxu0 0.0
    %415 = vmatpush1.msra.mxu0 0.0
    %416 = vmatprep.subr.mxu0 0.0
    %417 = vmatpush1.msra.mxu0 0.0
    %418 = vmatprep.subr.mxu0 0.0
    %419 = vmatpush1.msra.mxu0 0.0
    %420 = vmatprep.subr.mxu0 0.0
    %421 = vmatpush1.msra.mxu0 0.0
    %422 = vmatprep.subr.mxu0 0.0
    %423 = vmatpush1.msra.mxu0 0.0
    %424 = vmatprep.subr.mxu0 0.0
    %425 = vmatpush1.msra.mxu0 0.0
    %426 = vmatprep.subr.mxu0 0.0
    %427 = vmatpush1.msra.mxu0 0.0
    %428 = vmatprep.subr.mxu0 0.0
    %429 = vmatpush1.msra.mxu0 0.0
    %430 = vmatprep.subr.mxu0 0.0
    %431 = vmatpush1.msra.mxu0 0.0
    %432 = vmatprep.subr.mxu0 0.0
    %433 = vmatpush1.msra.mxu0 0.0
    %434 = vmatprep.subr.mxu0 0.0
    %435 = vmatpush1.msra.mxu0 0.0
    %436 = vmatprep.subr.mxu0 0.0
    %437 = vmatpush1.msra.mxu0 0.0
    %438 = vmatprep.subr.mxu0 0.0
    %439 = vmatpush1.msra.mxu0 0.0
    %440 = vmatprep.subr.mxu0 0.0
    %441 = vmatpush1.msra.mxu0 0.0
    %442 = vmatprep.subr.mxu0 0.0
    %443 = vmatpush1.msra.mxu0 0.0
    %444 = vmatprep.subr.mxu0 0.0
    %445 = vmatpush1.msra.mxu0 0.0
    %446 = vmatprep.subr.mxu0 0.0
    %447 = vmatpush1.msra.mxu0 0.0
    %448 = vmatprep.subr.mxu0 0.0
    %449 = vmatpush1.msra.mxu0 0.0
    %450 = vmatprep.subr.mxu0 0.0
    %451 = vmatpush1.msra.mxu0 0.0
    %452 = vmatprep.subr.mxu0 0.0
    %453 = vmatpush1.msra.mxu0 0.0
    %454 = vmatprep.subr.mxu0 0.0
    %455 = vmatpush1.msra.mxu0 0.0
    %456 = vmatprep.mubr.f32.mxu0 0.0
    %457 = vmatmul.mubr.f32.gmra.mrb[0].mxu0 %v390
    %v458 = vpop.f32.mrb[0].mxu0
    %v459 = vadd.f32 0.0, %v458
    %v460 = vpop.f32.mrb[0].mxu0
    %461 = vdwg.mxu0
    %v462 = vadd.f32 %v386, %v459
    %v463 = vxor.u32 %v462, 2147483648
    %v464 = vmul.f32 %v463, 1.442695
    %v465 = vpow.pop %v464
    %v466 = vadd.f32 %v465, 1.0
    %v467 = vrcp.pop %v466
    %v468 = vmul.f32 1.0, %v467
    %v469 = vtanh.pop %v462
    %v470 = vmul.f32 %v468, %v378
    %472 = vrot.lane.b32.xlu0 %v469, 64
    %v473 = vpop.permute.xlu0 %472
    %v475 = vmul.f32 %v468, %v473
    %477 = vrot.lane.b32.xlu0 %v475, 32
    %v478 = vpop.permute.xlu0 %477
    %v480 = vadd.f32 %v470, %v478
    %v481 = vtanh.pop %v480
    %483 = vrot.lane.b32.xlu0 %v481, 64
    %v484 = vpop.permute.xlu0 %483
    %v486 = vmul.f32 %v468, %v484
    %s487 = scalar_lea.vmem [#allocation2], 24
    %v488 = vld [vmem:[%s487] sm:$0xff]
    %490 = vrot.lane.b32.xlu0 %v486, 32
    %v491 = vpop.permute.xlu0 %490
    %v492 = vsel %vm184, %v491, 0
    %494 = vmatprep.subr.mxu0 0.0
    %495 = vmatpush1.msra.mxu0 %v179
    %496 = vmatprep.subr.mxu0 0.0
    %497 = vmatpush1.msra.mxu0 %v180
    %498 = vmatprep.subr.mxu0 0.0
    %499 = vmatpush1.msra.mxu0 %v181
    %500 = vmatprep.subr.mxu0 0.0
    %501 = vmatpush1.msra.mxu0 %v182
    %502 = vmatprep.subr.mxu0 0.0
    %503 = vmatpush1.msra.mxu0 0.0
    %504 = vmatprep.subr.mxu0 0.0
    %505 = vmatpush1.msra.mxu0 0.0
    %506 = vmatprep.subr.mxu0 0.0
    %507 = vmatpush1.msra.mxu0 0.0
    %508 = vmatprep.subr.mxu0 0.0
    %509 = vmatpush1.msra.mxu0 0.0
    %510 = vmatprep.subr.mxu0 0.0
    %511 = vmatpush1.msra.mxu0 0.0
    %512 = vmatprep.subr.mxu0 0.0
    %513 = vmatpush1.msra.mxu0 0.0
    %514 = vmatprep.subr.mxu0 0.0
    %515 = vmatpush1.msra.mxu0 0.0
    %516 = vmatprep.subr.mxu0 0.0
    %517 = vmatpush1.msra.mxu0 0.0
    %518 = vmatprep.subr.mxu0 0.0
    %519 = vmatpush1.msra.mxu0 0.0
    %520 = vmatprep.subr.mxu0 0.0
    %521 = vmatpush1.msra.mxu0 0.0
    %522 = vmatprep.subr.mxu0 0.0
    %523 = vmatpush1.msra.mxu0 0.0
    %524 = vmatprep.subr.mxu0 0.0
    %525 = vmatpush1.msra.mxu0 0.0
    %526 = vmatprep.subr.mxu0 0.0
    %527 = vmatpush1.msra.mxu0 0.0
    %528 = vmatprep.subr.mxu0 0.0
    %529 = vmatpush1.msra.mxu0 0.0
    %530 = vmatprep.subr.mxu0 0.0
    %531 = vmatpush1.msra.mxu0 0.0
    %532 = vmatprep.subr.mxu0 0.0
    %533 = vmatpush1.msra.mxu0 0.0
    %534 = vmatprep.subr.mxu0 0.0
    %535 = vmatpush1.msra.mxu0 0.0
    %536 = vmatprep.subr.mxu0 0.0
    %537 = vmatpush1.msra.mxu0 0.0
    %538 = vmatprep.subr.mxu0 0.0
    %539 = vmatpush1.msra.mxu0 0.0
    %540 = vmatprep.subr.mxu0 0.0
    %541 = vmatpush1.msra.mxu0 0.0
    %542 = vmatprep.subr.mxu0 0.0
    %543 = vmatpush1.msra.mxu0 0.0
    %544 = vmatprep.subr.mxu0 0.0
    %545 = vmatpush1.msra.mxu0 0.0
    %546 = vmatprep.subr.mxu0 0.0
    %547 = vmatpush1.msra.mxu0 0.0
    %548 = vmatprep.subr.mxu0 0.0
    %549 = vmatpush1.msra.mxu0 0.0
    %550 = vmatprep.subr.mxu0 0.0
    %551 = vmatpush1.msra.mxu0 0.0
    %552 = vmatprep.subr.mxu0 0.0
    %553 = vmatpush1.msra.mxu0 0.0
    %554 = vmatprep.subr.mxu0 0.0
    %555 = vmatpush1.msra.mxu0 0.0
    %556 = vmatprep.subr.mxu0 0.0
    %557 = vmatpush1.msra.mxu0 0.0
    %558 = vmatprep.mubr.f32.mxu0 0.0
    %559 = vmatmul.mubr.f32.gmra.mrb[0].mxu0 %v492
    %v560 = vpop.f32.mrb[0].mxu0
    %v561 = vadd.f32 0.0, %v560
    %v562 = vpop.f32.mrb[0].mxu0
    %563 = vdwg.mxu0
    %v564 = vadd.f32 %v488, %v561
    %v565 = vxor.u32 %v564, 2147483648
    %v566 = vmul.f32 %v565, 1.442695
    %v567 = vpow.pop %v566
    %v568 = vadd.f32 %v567, 1.0
    %v569 = vrcp.pop %v568
    %v570 = vmul.f32 1.0, %v569
    %v571 = vtanh.pop %v564
    %v572 = vmul.f32 %v570, %v480
    %574 = vrot.lane.b32.xlu0 %v571, 64
    %v575 = vpop.permute.xlu0 %574
    %v577 = vmul.f32 %v570, %v575
    %579 = vrot.lane.b32.xlu0 %v577, 32
    %v580 = vpop.permute.xlu0 %579
    %v582 = vadd.f32 %v572, %v580
    %v583 = vtanh.pop %v582
    %585 = vrot.lane.b32.xlu0 %v583, 64
    %v586 = vpop.permute.xlu0 %585
    %v588 = vmul.f32 %v570, %v586
    %s589 = scalar_lea.vmem [#allocation2], 32
    %v590 = vld [vmem:[%s589] sm:$0xff]
    %592 = vrot.lane.b32.xlu0 %v588, 32
    %v593 = vpop.permute.xlu0 %592
    %v594 = vsel %vm184, %v593, 0
    %596 = vmatprep.subr.mxu0 0.0
    %597 = vmatpush1.msra.mxu0 %v179
    %598 = vmatprep.subr.mxu0 0.0
    %599 = vmatpush1.msra.mxu0 %v180
    %600 = vmatprep.subr.mxu0 0.0
    %601 = vmatpush1.msra.mxu0 %v181
    %602 = vmatprep.subr.mxu0 0.0
    %603 = vmatpush1.msra.mxu0 %v182
    %604 = vmatprep.subr.mxu0 0.0
    %605 = vmatpush1.msra.mxu0 0.0
    %606 = vmatprep.subr.mxu0 0.0
    %607 = vmatpush1.msra.mxu0 0.0
    %608 = vmatprep.subr.mxu0 0.0
    %609 = vmatpush1.msra.mxu0 0.0
    %610 = vmatprep.subr.mxu0 0.0
    %611 = vmatpush1.msra.mxu0 0.0
    %612 = vmatprep.subr.mxu0 0.0
    %613 = vmatpush1.msra.mxu0 0.0
    %614 = vmatprep.subr.mxu0 0.0
    %615 = vmatpush1.msra.mxu0 0.0
    %616 = vmatprep.subr.mxu0 0.0
    %617 = vmatpush1.msra.mxu0 0.0
    %618 = vmatprep.subr.mxu0 0.0
    %619 = vmatpush1.msra.mxu0 0.0
    %620 = vmatprep.subr.mxu0 0.0
    %621 = vmatpush1.msra.mxu0 0.0
    %622 = vmatprep.subr.mxu0 0.0
    %623 = vmatpush1.msra.mxu0 0.0
    %624 = vmatprep.subr.mxu0 0.0
    %625 = vmatpush1.msra.mxu0 0.0
    %626 = vmatprep.subr.mxu0 0.0
    %627 = vmatpush1.msra.mxu0 0.0
    %628 = vmatprep.subr.mxu0 0.0
    %629 = vmatpush1.msra.mxu0 0.0
    %630 = vmatprep.subr.mxu0 0.0
    %631 = vmatpush1.msra.mxu0 0.0
    %632 = vmatprep.subr.mxu0 0.0
    %633 = vmatpush1.msra.mxu0 0.0
    %634 = vmatprep.subr.mxu0 0.0
    %635 = vmatpush1.msra.mxu0 0.0
    %636 = vmatprep.subr.mxu0 0.0
    %637 = vmatpush1.msra.mxu0 0.0
    %638 = vmatprep.subr.mxu0 0.0
    %639 = vmatpush1.msra.mxu0 0.0
    %640 = vmatprep.subr.mxu0 0.0
    %641 = vmatpush1.msra.mxu0 0.0
    %642 = vmatprep.subr.mxu0 0.0
    %643 = vmatpush1.msra.mxu0 0.0
    %644 = vmatprep.subr.mxu0 0.0
    %645 = vmatpush1.msra.mxu0 0.0
    %646 = vmatprep.subr.mxu0 0.0
    %647 = vmatpush1.msra.mxu0 0.0
    %648 = vmatprep.subr.mxu0 0.0
    %649 = vmatpush1.msra.mxu0 0.0
    %650 = vmatprep.subr.mxu0 0.0
    %651 = vmatpush1.msra.mxu0 0.0
    %652 = vmatprep.subr.mxu0 0.0
    %653 = vmatpush1.msra.mxu0 0.0
    %654 = vmatprep.subr.mxu0 0.0
    %655 = vmatpush1.msra.mxu0 0.0
    %656 = vmatprep.subr.mxu0 0.0
    %657 = vmatpush1.msra.mxu0 0.0
    %658 = vmatprep.subr.mxu0 0.0
    %659 = vmatpush1.msra.mxu0 0.0
    %660 = vmatprep.mubr.f32.mxu0 0.0
    %661 = vmatmul.mubr.f32.gmra.mrb[0].mxu0 %v594
    %v662 = vpop.f32.mrb[0].mxu0
    %v663 = vadd.f32 0.0, %v662
    %v664 = vpop.f32.mrb[0].mxu0
    %665 = vdwg.mxu0
    %v666 = vadd.f32 %v590, %v663
    %v667 = vxor.u32 %v666, 2147483648
    %v668 = vmul.f32 %v667, 1.442695
    %v669 = vpow.pop %v668
    %v670 = vadd.f32 %v669, 1.0
    %v671 = vrcp.pop %v670
    %v672 = vmul.f32 1.0, %v671
    %v673 = vtanh.pop %v666
    %v674 = vmul.f32 %v672, %v582
    %676 = vrot.lane.b32.xlu0 %v673, 64
    %v677 = vpop.permute.xlu0 %676
    %v679 = vmul.f32 %v672, %v677
    %681 = vrot.lane.b32.xlu0 %v679, 32
    %v682 = vpop.permute.xlu0 %681
    %v684 = vadd.f32 %v674, %v682
    %v685 = vtanh.pop %v684
    %687 = vrot.lane.b32.xlu0 %v685, 64
    %v688 = vpop.permute.xlu0 %687
    %v690 = vmul.f32 %v672, %v688
    %s691 = scalar_lea.vmem [#allocation2], 40
    %v692 = vld [vmem:[%s691] sm:$0xff]
    %694 = vrot.lane.b32.xlu0 %v690, 32
    %v695 = vpop.permute.xlu0 %694
    %v696 = vsel %vm184, %v695, 0
    %698 = vmatprep.subr.mxu0 0.0
    %699 = vmatpush1.msra.mxu0 %v179
    %700 = vmatprep.subr.mxu0 0.0
    %701 = vmatpush1.msra.mxu0 %v180
    %702 = vmatprep.subr.mxu0 0.0
    %703 = vmatpush1.msra.mxu0 %v181
    %704 = vmatprep.subr.mxu0 0.0
    %705 = vmatpush1.msra.mxu0 %v182
    %706 = vmatprep.subr.mxu0 0.0
    %707 = vmatpush1.msra.mxu0 0.0
    %708 = vmatprep.subr.mxu0 0.0
    %709 = vmatpush1.msra.mxu0 0.0
    %710 = vmatprep.subr.mxu0 0.0
    %711 = vmatpush1.msra.mxu0 0.0
    %712 = vmatprep.subr.mxu0 0.0
    %713 = vmatpush1.msra.mxu0 0.0
    %714 = vmatprep.subr.mxu0 0.0
    %715 = vmatpush1.msra.mxu0 0.0
    %716 = vmatprep.subr.mxu0 0.0
    %717 = vmatpush1.msra.mxu0 0.0
    %718 = vmatprep.subr.mxu0 0.0
    %719 = vmatpush1.msra.mxu0 0.0
    %720 = vmatprep.subr.mxu0 0.0
    %721 = vmatpush1.msra.mxu0 0.0
    %722 = vmatprep.subr.mxu0 0.0
    %723 = vmatpush1.msra.mxu0 0.0
    %724 = vmatprep.subr.mxu0 0.0
    %725 = vmatpush1.msra.mxu0 0.0
    %726 = vmatprep.subr.mxu0 0.0
    %727 = vmatpush1.msra.mxu0 0.0
    %728 = vmatprep.subr.mxu0 0.0
    %729 = vmatpush1.msra.mxu0 0.0
    %730 = vmatprep.subr.mxu0 0.0
    %731 = vmatpush1.msra.mxu0 0.0
    %732 = vmatprep.subr.mxu0 0.0
    %733 = vmatpush1.msra.mxu0 0.0
    %734 = vmatprep.subr.mxu0 0.0
    %735 = vmatpush1.msra.mxu0 0.0
    %736 = vmatprep.subr.mxu0 0.0
    %737 = vmatpush1.msra.mxu0 0.0
    %738 = vmatprep.subr.mxu0 0.0
    %739 = vmatpush1.msra.mxu0 0.0
    %740 = vmatprep.subr.mxu0 0.0
    %741 = vmatpush1.msra.mxu0 0.0
    %742 = vmatprep.subr.mxu0 0.0
    %743 = vmatpush1.msra.mxu0 0.0
    %744 = vmatprep.subr.mxu0 0.0
    %745 = vmatpush1.msra.mxu0 0.0
    %746 = vmatprep.subr.mxu0 0.0
    %747 = vmatpush1.msra.mxu0 0.0
    %748 = vmatprep.subr.mxu0 0.0
    %749 = vmatpush1.msra.mxu0 0.0
    %750 = vmatprep.subr.mxu0 0.0
    %751 = vmatpush1.msra.mxu0 0.0
    %752 = vmatprep.subr.mxu0 0.0
    %753 = vmatpush1.msra.mxu0 0.0
    %754 = vmatprep.subr.mxu0 0.0
    %755 = vmatpush1.msra.mxu0 0.0
    %756 = vmatprep.subr.mxu0 0.0
    %757 = vmatpush1.msra.mxu0 0.0
    %758 = vmatprep.subr.mxu0 0.0
    %759 = vmatpush1.msra.mxu0 0.0
    %760 = vmatprep.subr.mxu0 0.0
    %761 = vmatpush1.msra.mxu0 0.0
    %762 = vmatprep.mubr.f32.mxu0 0.0
    %763 = vmatmul.mubr.f32.gmra.mrb[0].mxu0 %v696
    %v764 = vpop.f32.mrb[0].mxu0
    %v765 = vadd.f32 0.0, %v764
    %v766 = vpop.f32.mrb[0].mxu0
    %767 = vdwg.mxu0
    %v768 = vadd.f32 %v692, %v765
    %v769 = vxor.u32 %v768, 2147483648
    %v770 = vmul.f32 %v769, 1.442695
    %v771 = vpow.pop %v770
    %v772 = vadd.f32 %v771, 1.0
    %v773 = vrcp.pop %v772
    %v774 = vmul.f32 1.0, %v773
    %v775 = vtanh.pop %v768
    %v776 = vmul.f32 %v774, %v684
    %778 = vrot.lane.b32.xlu0 %v775, 64
    %v779 = vpop.permute.xlu0 %778
    %v781 = vmul.f32 %v774, %v779
    %783 = vrot.lane.b32.xlu0 %v781, 32
    %v784 = vpop.permute.xlu0 %783
    %v786 = vadd.f32 %v776, %v784
    %v787 = vtanh.pop %v786
    %789 = vrot.lane.b32.xlu0 %v787, 64
    %v790 = vpop.permute.xlu0 %789
    %v792 = vmul.f32 %v774, %v790
    %s793 = scalar_lea.vmem [#allocation2], 48
    %v794 = vld [vmem:[%s793] sm:$0xff]
    %796 = vrot.lane.b32.xlu0 %v792, 32
    %v797 = vpop.permute.xlu0 %796
    %v798 = vsel %vm184, %v797, 0
    %800 = vmatprep.subr.mxu0 0.0
    %801 = vmatpush1.msra.mxu0 %v179
    %802 = vmatprep.subr.mxu0 0.0
    %803 = vmatpush1.msra.mxu0 %v180
    %804 = vmatprep.subr.mxu0 0.0
    %805 = vmatpush1.msra.mxu0 %v181
    %806 = vmatprep.subr.mxu0 0.0
    %807 = vmatpush1.msra.mxu0 %v182
    %808 = vmatprep.subr.mxu0 0.0
    %809 = vmatpush1.msra.mxu0 0.0
    %810 = vmatprep.subr.mxu0 0.0
    %811 = vmatpush1.msra.mxu0 0.0
    %812 = vmatprep.subr.mxu0 0.0
    %813 = vmatpush1.msra.mxu0 0.0
    %814 = vmatprep.subr.mxu0 0.0
    %815 = vmatpush1.msra.mxu0 0.0
    %816 = vmatprep.subr.mxu0 0.0
    %817 = vmatpush1.msra.mxu0 0.0
    %818 = vmatprep.subr.mxu0 0.0
    %819 = vmatpush1.msra.mxu0 0.0
    %820 = vmatprep.subr.mxu0 0.0
    %821 = vmatpush1.msra.mxu0 0.0
    %822 = vmatprep.subr.mxu0 0.0
    %823 = vmatpush1.msra.mxu0 0.0
    %824 = vmatprep.subr.mxu0 0.0
    %825 = vmatpush1.msra.mxu0 0.0
    %826 = vmatprep.subr.mxu0 0.0
    %827 = vmatpush1.msra.mxu0 0.0
    %828 = vmatprep.subr.mxu0 0.0
    %829 = vmatpush1.msra.mxu0 0.0
    %830 = vmatprep.subr.mxu0 0.0
    %831 = vmatpush1.msra.mxu0 0.0
    %832 = vmatprep.subr.mxu0 0.0
    %833 = vmatpush1.msra.mxu0 0.0
    %834 = vmatprep.subr.mxu0 0.0
    %835 = vmatpush1.msra.mxu0 0.0
    %836 = vmatprep.subr.mxu0 0.0
    %837 = vmatpush1.msra.mxu0 0.0
    %838 = vmatprep.subr.mxu0 0.0
    %839 = vmatpush1.msra.mxu0 0.0
    %840 = vmatprep.subr.mxu0 0.0
    %841 = vmatpush1.msra.mxu0 0.0
    %842 = vmatprep.subr.mxu0 0.0
    %843 = vmatpush1.msra.mxu0 0.0
    %844 = vmatprep.subr.mxu0 0.0
    %845 = vmatpush1.msra.mxu0 0.0
    %846 = vmatprep.subr.mxu0 0.0
    %847 = vmatpush1.msra.mxu0 0.0
    %848 = vmatprep.subr.mxu0 0.0
    %849 = vmatpush1.msra.mxu0 0.0
    %850 = vmatprep.subr.mxu0 0.0
    %851 = vmatpush1.msra.mxu0 0.0
    %852 = vmatprep.subr.mxu0 0.0
    %853 = vmatpush1.msra.mxu0 0.0
    %854 = vmatprep.subr.mxu0 0.0
    %855 = vmatpush1.msra.mxu0 0.0
    %856 = vmatprep.subr.mxu0 0.0
    %857 = vmatpush1.msra.mxu0 0.0
    %858 = vmatprep.subr.mxu0 0.0
    %859 = vmatpush1.msra.mxu0 0.0
    %860 = vmatprep.subr.mxu0 0.0
    %861 = vmatpush1.msra.mxu0 0.0
    %862 = vmatprep.subr.mxu0 0.0
    %863 = vmatpush1.msra.mxu0 0.0
    %864 = vmatprep.mubr.f32.mxu0 0.0
    %865 = vmatmul.mubr.f32.gmra.mrb[0].mxu0 %v798
    %v866 = vpop.f32.mrb[0].mxu0
    %v867 = vadd.f32 0.0, %v866
    %v868 = vpop.f32.mrb[0].mxu0
    %869 = vdwg.mxu0
    %v870 = vadd.f32 %v794, %v867
    %v871 = vxor.u32 %v870, 2147483648
    %v872 = vmul.f32 %v871, 1.442695
    %v873 = vpow.pop %v872
    %v874 = vadd.f32 %v873, 1.0
    %v875 = vrcp.pop %v874
    %v876 = vmul.f32 1.0, %v875
    %v877 = vtanh.pop %v870
    %v878 = vmul.f32 %v876, %v786
    %880 = vrot.lane.b32.xlu0 %v877, 64
    %v881 = vpop.permute.xlu0 %880
    %v883 = vmul.f32 %v876, %v881
    %885 = vrot.lane.b32.xlu0 %v883, 32
    %v886 = vpop.permute.xlu0 %885
    %v888 = vadd.f32 %v878, %v886
    %v889 = vtanh.pop %v888
    %891 = vrot.lane.b32.xlu0 %v889, 64
    %v892 = vpop.permute.xlu0 %891
    %v894 = vmul.f32 %v876, %v892
    %s895 = scalar_lea.vmem [#allocation2], 56
    %v896 = vld [vmem:[%s895] sm:$0xff]
    %898 = vrot.lane.b32.xlu0 %v894, 32
    %v899 = vpop.permute.xlu0 %898
    %v900 = vsel %vm184, %v899, 0
    %902 = vmatprep.subr.mxu0 0.0
    %903 = vmatpush1.msra.mxu0 %v179
    %904 = vmatprep.subr.mxu0 0.0
    %905 = vmatpush1.msra.mxu0 %v180
    %906 = vmatprep.subr.mxu0 0.0
    %907 = vmatpush1.msra.mxu0 %v181
    %908 = vmatprep.subr.mxu0 0.0
    %909 = vmatpush1.msra.mxu0 %v182
    %910 = vmatprep.subr.mxu0 0.0
    %911 = vmatpush1.msra.mxu0 0.0
    %912 = vmatprep.subr.mxu0 0.0
    %913 = vmatpush1.msra.mxu0 0.0
    %914 = vmatprep.subr.mxu0 0.0
    %915 = vmatpush1.msra.mxu0 0.0
    %916 = vmatprep.subr.mxu0 0.0
    %917 = vmatpush1.msra.mxu0 0.0
    %918 = vmatprep.subr.mxu0 0.0
    %919 = vmatpush1.msra.mxu0 0.0
    %920 = vmatprep.subr.mxu0 0.0
    %921 = vmatpush1.msra.mxu0 0.0
    %922 = vmatprep.subr.mxu0 0.0
    %923 = vmatpush1.msra.mxu0 0.0
    %924 = vmatprep.subr.mxu0 0.0
    %925 = vmatpush1.msra.mxu0 0.0
    %926 = vmatprep.subr.mxu0 0.0
    %927 = vmatpush1.msra.mxu0 0.0
    %928 = vmatprep.subr.mxu0 0.0
    %929 = vmatpush1.msra.mxu0 0.0
    %930 = vmatprep.subr.mxu0 0.0
    %931 = vmatpush1.msra.mxu0 0.0
    %932 = vmatprep.subr.mxu0 0.0
    %933 = vmatpush1.msra.mxu0 0.0
    %934 = vmatprep.subr.mxu0 0.0
    %935 = vmatpush1.msra.mxu0 0.0
    %936 = vmatprep.subr.mxu0 0.0
    %937 = vmatpush1.msra.mxu0 0.0
    %938 = vmatprep.subr.mxu0 0.0
    %939 = vmatpush1.msra.mxu0 0.0
    %940 = vmatprep.subr.mxu0 0.0
    %941 = vmatpush1.msra.mxu0 0.0
    %942 = vmatprep.subr.mxu0 0.0
    %943 = vmatpush1.msra.mxu0 0.0
    %944 = vmatprep.subr.mxu0 0.0
    %945 = vmatpush1.msra.mxu0 0.0
    %946 = vmatprep.subr.mxu0 0.0
    %947 = vmatpush1.msra.mxu0 0.0
    %948 = vmatprep.subr.mxu0 0.0
    %949 = vmatpush1.msra.mxu0 0.0
    %950 = vmatprep.subr.mxu0 0.0
    %951 = vmatpush1.msra.mxu0 0.0
    %952 = vmatprep.subr.mxu0 0.0
    %953 = vmatpush1.msra.mxu0 0.0
    %954 = vmatprep.subr.mxu0 0.0
    %955 = vmatpush1.msra.mxu0 0.0
    %956 = vmatprep.subr.mxu0 0.0
    %957 = vmatpush1.msra.mxu0 0.0
    %958 = vmatprep.subr.mxu0 0.0
    %959 = vmatpush1.msra.mxu0 0.0
    %960 = vmatprep.subr.mxu0 0.0
    %961 = vmatpush1.msra.mxu0 0.0
    %962 = vmatprep.subr.mxu0 0.0
    %963 = vmatpush1.msra.mxu0 0.0
    %964 = vmatprep.subr.mxu0 0.0
    %965 = vmatpush1.msra.mxu0 0.0
    %966 = vmatprep.mubr.f32.mxu0 0.0
    %967 = vmatmul.mubr.f32.gmra.mrb[0].mxu0 %v900
    %v968 = vpop.f32.mrb[0].mxu0
    %v969 = vadd.f32 0.0, %v968
    %v970 = vpop.f32.mrb[0].mxu0
    %971 = vdwg.mxu0
    %v972 = vadd.f32 %v896, %v969
    %v973 = vxor.u32 %v972, 2147483648
    %v974 = vmul.f32 %v973, 1.442695
    %v975 = vpow.pop %v974
    %v976 = vadd.f32 %v975, 1.0
    %v977 = vrcp.pop %v976
    %v978 = vmul.f32 1.0, %v977
    %v979 = vtanh.pop %v972
    %v980 = vmul.f32 %v978, %v888
    %982 = vrot.lane.b32.xlu0 %v979, 64
    %v983 = vpop.permute.xlu0 %982
    %v985 = vmul.f32 %v978, %v983
    %987 = vrot.lane.b32.xlu0 %v985, 32
    %v988 = vpop.permute.xlu0 %987
    %v990 = vadd.f32 %v980, %v988
    %v991 = vtanh.pop %v990
    %993 = vrot.lane.b32.xlu0 %v991, 64
    %v994 = vpop.permute.xlu0 %993
    %v996 = vmul.f32 %v978, %v994
    %v997 = vld [vmem:[%s4] sm:$0xff]
    %v998 = vld [vmem:[%s4 + $0x8] sm:$0xff]
    %v999 = vld [vmem:[%s4 + $0x10] sm:$0xff]
    %v1000 = vld [vmem:[%s4 + $0x18] sm:$0xff]
    %v1001 = vld [vmem:[%s5] sm:$0x1]
    %v1003 = vlaneseq
    %v1004 = vshrl.u32 %v1003, 7
    %v1005 = vsub.s32 0, %v1004
    %v1006 = vrot.slane %v1001, %v1005
    %1009 = vrot.lane.b32.xlu0 %v996, 32
    %v1010 = vpop.permute.xlu0 %1009
    %v1011 = vsel %vm184, %v1010, 0
    %1013 = vmatprep.subr.mxu0 0.0
    %1014 = vmatpush1.msra.mxu0 %v997
    %1015 = vmatprep.subr.mxu0 0.0
    %1016 = vmatpush1.msra.mxu0 %v998
    %1017 = vmatprep.subr.mxu0 0.0
    %1018 = vmatpush1.msra.mxu0 %v999
    %1019 = vmatprep.subr.mxu0 0.0
    %1020 = vmatpush1.msra.mxu0 %v1000
    %1021 = vmatprep.subr.mxu0 0.0
    %1022 = vmatpush1.msra.mxu0 0.0
    %1023 = vmatprep.subr.mxu0 0.0
    %1024 = vmatpush1.msra.mxu0 0.0
    %1025 = vmatprep.subr.mxu0 0.0
    %1026 = vmatpush1.msra.mxu0 0.0
    %1027 = vmatprep.subr.mxu0 0.0
    %1028 = vmatpush1.msra.mxu0 0.0
    %1029 = vmatprep.subr.mxu0 0.0
    %1030 = vmatpush1.msra.mxu0 0.0
    %1031 = vmatprep.subr.mxu0 0.0
    %1032 = vmatpush1.msra.mxu0 0.0
    %1033 = vmatprep.subr.mxu0 0.0
    %1034 = vmatpush1.msra.mxu0 0.0
    %1035 = vmatprep.subr.mxu0 0.0
    %1036 = vmatpush1.msra.mxu0 0.0
    %1037 = vmatprep.subr.mxu0 0.0
    %1038 = vmatpush1.msra.mxu0 0.0
    %1039 = vmatprep.subr.mxu0 0.0
    %1040 = vmatpush1.msra.mxu0 0.0
    %1041 = vmatprep.subr.mxu0 0.0
    %1042 = vmatpush1.msra.mxu0 0.0
    %1043 = vmatprep.subr.mxu0 0.0
    %1044 = vmatpush1.msra.mxu0 0.0
    %1045 = vmatprep.subr.mxu0 0.0
    %1046 = vmatpush1.msra.mxu0 0.0
    %1047 = vmatprep.subr.mxu0 0.0
    %1048 = vmatpush1.msra.mxu0 0.0
    %1049 = vmatprep.subr.mxu0 0.0
    %1050 = vmatpush1.msra.mxu0 0.0
    %1051 = vmatprep.subr.mxu0 0.0
    %1052 = vmatpush1.msra.mxu0 0.0
    %1053 = vmatprep.subr.mxu0 0.0
    %1054 = vmatpush1.msra.mxu0 0.0
    %1055 = vmatprep.subr.mxu0 0.0
    %1056 = vmatpush1.msra.mxu0 0.0
    %1057 = vmatprep.subr.mxu0 0.0
    %1058 = vmatpush1.msra.mxu0 0.0
    %1059 = vmatprep.subr.mxu0 0.0
    %1060 = vmatpush1.msra.mxu0 0.0
    %1061 = vmatprep.subr.mxu0 0.0
    %1062 = vmatpush1.msra.mxu0 0.0
    %1063 = vmatprep.subr.mxu0 0.0
    %1064 = vmatpush1.msra.mxu0 0.0
    %1065 = vmatprep.subr.mxu0 0.0
    %1066 = vmatpush1.msra.mxu0 0.0
    %1067 = vmatprep.subr.mxu0 0.0
    %1068 = vmatpush1.msra.mxu0 0.0
    %1069 = vmatprep.subr.mxu0 0.0
    %1070 = vmatpush1.msra.mxu0 0.0
    %1071 = vmatprep.subr.mxu0 0.0
    %1072 = vmatpush1.msra.mxu0 0.0
    %1073 = vmatprep.subr.mxu0 0.0
    %1074 = vmatpush1.msra.mxu0 0.0
    %1075 = vmatprep.subr.mxu0 0.0
    %1076 = vmatpush1.msra.mxu0 0.0
    %1077 = vmatprep.mubr.f32.mxu0 0.0
    %1078 = vmatmul.mubr.f32.gmra.mrb[0].mxu0 %v1011
    %v1079 = vpop.f32.mrb[0].mxu0
    %v1080 = vadd.f32 %v1006, %v1079
    %v1081 = vpop.f32.mrb[0].mxu0
    %1082 = vdwg.mxu0
    %1083 = vst [vmem:[#allocation3] sm:$0xff] %v1080
    // Predicated region
    $region26: #{tpu_custom_call.1} parent=1 // pred_check
      _
    $region27: #{tpu_custom_call.1} parent=1 // pred_check_branch
      %1085 = sbr.rel (0) target = $region29
    $region28: #{tpu_custom_call.1} parent=1 // pred_region
      %s1087 = ssub.s32 128, 128
      %1088 = vsyncadd [#allocation4], %s1087
      %s1090 = sshll.u32 [#allocation3], 4
      %s1091 = int_to_ptr.vmem [resolvable:$true] %s1090
      %1093 = dma.vmem_to_hbm [thread:$0]  %s1091, 128, %s6, [#allocation4]
    $region29: #{tpu_custom_call.1} parent=1 // pred_fallthru
      _
    // Predicated region
    $region30: #{tpu_custom_call.1} parent=1 // pred_check
      _
    $region31: #{tpu_custom_call.1} parent=1 // pred_check_branch
      %1095 = sbr.rel (0) target = $region33
    $region32: #{tpu_custom_call.1} parent=1 // pred_region
      %1096 = dma.done [#allocation4], 128
    $region33: #{tpu_custom_call.1} parent=1 // pred_fallthru
      _
    %1097 = vsyncpa [#allocation4], 1

</llo_original>
